<compile_context>
chip_gen: v6e
topology: v6e:2x2x1
jax: 0.10.0
libtpu: 0.0.40
codegen_flags: <defaults>
</compile_context>

<pallas_src>
import functools
from typing import NamedTuple

import jax
import jax.numpy as jnp
from jax import lax
from jax.experimental import pallas as pl
from jax.experimental.pallas import tpu as pltpu


def _round_up(x: int, m: int) -> int:
    return ((x + m - 1) // m) * m


def _pick_tile(dim: int, max_tile: int, align: int) -> int:
    """Divisor-aware tile choice.

    If the (align-rounded) dim fits one max-size tile, use the whole dim as a
    single tile (zero waste, zero re-reads).  Otherwise pick from
    {max, max/2, max/4, max/8} the tile minimizing padded extent; ties go to
    the larger tile (fewer grid steps / fewer operand re-reads).
    """
    dim_al = _round_up(dim, align)
    if dim_al <= max_tile:
        return dim_al
    best_t = max_tile
    best_p = _round_up(dim, max_tile)
    t = max_tile // 2
    while t >= align and t >= max_tile // 8:
        p = _round_up(dim, t)
        if p < best_p:
            best_t, best_p = t, p
        t //= 2
    return best_t


# ---------------------------------------------------------------------------
# Kernel bodies
# ---------------------------------------------------------------------------
def _fc_relu_kernel_acc(x_ref, w_ref, b_ref, o_ref, acc_ref, *, precision):
    """Multi-K-step body: f32 VMEM accumulator, bias+ReLU epilogue once."""
    k = pl.program_id(2)

    @pl.when(k == 0)
    def _init():
        acc_ref[...] = jnp.zeros_like(acc_ref)

    acc_ref[...] += jnp.dot(
        x_ref[...], w_ref[...],
        preferred_element_type=jnp.float32, precision=precision)

    @pl.when(k == pl.num_programs(2) - 1)
    def _epilogue():
        y = acc_ref[...] + b_ref[...].astype(jnp.float32)
        o_ref[...] = jnp.maximum(y, 0.0).astype(o_ref.dtype)


def _fc_relu_kernel_1k(x_ref, w_ref, b_ref, o_ref, *, precision):
    """Whole reduction in one tile: no accumulator scratch, no per-k RMW."""
    y = jnp.dot(x_ref[...], w_ref[...],
                preferred_element_type=jnp.float32, precision=precision)
    y = y + b_ref[...].astype(jnp.float32)
    o_ref[...] = jnp.maximum(y, 0.0).astype(o_ref.dtype)


# ---------------------------------------------------------------------------
# Parameter preparation (run ONCE, outside the per-call hot path)
# ---------------------------------------------------------------------------
class FCParams(NamedTuple):
    wp: jax.Array     # (cinp, coutp) pre-transposed, padded, compute dtype
    bp: jax.Array     # (1, coutp) f32
    cin: int
    cout: int
    tn: int
    tk: int


def prepare_fc_params(weight, bias, *, compute_dtype=None,
                      tn_max=1024, tk_max=1024) -> FCParams:
    """Hoist weight transpose / pad / cast out of the forward path.

    weight: (chans_out, chans_in) -- PyTorch nn.Linear convention
    bias:   (chans_out,)
    """
    cout, cin = weight.shape
    dt = jnp.dtype(compute_dtype) if compute_dtype is not None else weight.dtype

    tn = _pick_tile(cout, tn_max, 128)
    tk = _pick_tile(cin, tk_max, 128)
    coutp = _round_up(cout, tn)
    cinp = _round_up(cin, tk)

    w_t = jnp.asarray(weight).astype(dt).T          # (cin, cout), lane-dense
    if (cinp, coutp) != (cin, cout):
        w_t = jnp.pad(w_t, ((0, cinp - cin), (0, coutp - cout)))

    b = jnp.asarray(bias).astype(jnp.float32)
    if coutp != cout:
        b = jnp.pad(b, (0, coutp - cout))
    return FCParams(w_t, b.reshape(1, coutp), cin, cout, tn, tk)


# ---------------------------------------------------------------------------
# Forward (hot path): ReLU(x @ W^T + b)
# ---------------------------------------------------------------------------
def fc_layer_apply(x, params: FCParams, *, tm_max=512, precision=None):
    B, cin = x.shape
    assert cin == params.cin, "weight/input feature mismatch"
    dt = params.wp.dtype
    out_dtype = x.dtype
    cinp, coutp = params.wp.shape
    tn, tk = params.tn, params.tk

    if precision is None:
        precision = (lax.Precision.HIGHEST if dt == jnp.dtype(jnp.float32)
                     else lax.Precision.DEFAULT)

    # bf16 packs 16 rows per sublane pair; f32 needs 8.
    m_align = 16 if dt == jnp.dtype(jnp.bfloat16) else 8
    tm = _pick_tile(B, tm_max, m_align)
    Bp = _round_up(B, tm)

    # Guarantee >=2 output tiles where possible so both v7x TensorCores
    # get work under "parallel" semantics (no effect on v5e/v6e).
    if (Bp // tm) * (coutp // tn) == 1:
        if tn >= 2 * 128 and (tn // 2) % 128 == 0:
            tn //= 2
        elif tm >= 2 * m_align and (tm // 2) % m_align == 0:
            tm //= 2
            Bp = _round_up(B, tm)

    n_m, n_n, n_k = Bp // tm, coutp // tn, cinp // tk

    xq = x.astype(dt)
    if (Bp, cinp) != (B, cin):
        xq = jnp.pad(xq, ((0, Bp - B), (0, cinp - cin)))

    in_isz = jnp.dtype(dt).itemsize
    out_isz = jnp.dtype(out_dtype).itemsize

    # Double-buffered tile working set + accumulator; used for vmem_limit.
    vmem_needed = 2 * (tm * tk * in_isz + tk * tn * in_isz
                       + tm * tn * out_isz + tn * 4)
    if n_k > 1:
        vmem_needed += tm * tn * 4
    vmem_limit = max(16 << 20, min(vmem_needed + (4 << 20), 64 << 20))

    cost = pl.CostEstimate(
        flops=2 * Bp * cinp * coutp,
        transcendentals=0,
        bytes_accessed=(Bp * cinp * in_isz * n_n            # x re-read per N tile
                        + cinp * coutp * in_isz * n_m       # W re-read per M tile
                        + coutp * 4 + Bp * coutp * out_isz),
    )

    if n_k == 1:
        kernel = functools.partial(_fc_relu_kernel_1k, precision=precision)
        grid = (n_m, n_n)
        in_specs = [
            pl.BlockSpec((tm, tk), lambda i, j: (i, 0)),   # x tile
            pl.BlockSpec((tk, tn), lambda i, j: (0, j)),   # W^T tile
            pl.BlockSpec((1, tn), lambda i, j: (0, j)),    # bias tile
        ]
        out_specs = pl.BlockSpec((tm, tn), lambda i, j: (i, j))
        scratch = []
        dims = ("parallel", "parallel")
    else:
        kernel = functools.partial(_fc_relu_kernel_acc, precision=precision)
        grid = (n_m, n_n, n_k)
        in_specs = [
            pl.BlockSpec((tm, tk), lambda i, j, k: (i, k)),   # x tile
            pl.BlockSpec((tk, tn), lambda i, j, k: (k, j)),   # W^T tile
            pl.BlockSpec((1, tn), lambda i, j, k: (0, j)),    # bias tile
        ]
        out_specs = pl.BlockSpec((tm, tn), lambda i, j, k: (i, j))
        scratch = [pltpu.VMEM((tm, tn), jnp.float32)]
        dims = ("parallel", "parallel", "arbitrary")

    out = pl.pallas_call(
        kernel,
        out_shape=jax.ShapeDtypeStruct((Bp, coutp), out_dtype),
        grid_spec=pltpu.PrefetchScalarGridSpec(
            num_scalar_prefetch=0,
            grid=grid,
            in_specs=in_specs,
            out_specs=out_specs,
            scratch_shapes=scratch,
        ),
        compiler_params=pltpu.CompilerParams(
            dimension_semantics=dims,
            vmem_limit_bytes=vmem_limit),
        cost_estimate=cost,
    )(xq, params.wp, params.bp)

    return out[:B, :params.cout]


def fc_layer(x, weight, bias, *, compute_dtype=None,
             tm_max=512, tn_max=1024, tk_max=1024, precision=None):
    """One-shot convenience wrapper (prefer caching prepare_fc_params)."""
    params = prepare_fc_params(weight, bias, compute_dtype=compute_dtype,
                               tn_max=tn_max, tk_max=tk_max)
    return fc_layer_apply(x, params, tm_max=tm_max, precision=precision)


# TODO(synk): only the default nn.ReLU activation is fused; other activation
# classes passed to FCLayer(activation=...) are not implemented here.

if __name__ == "__main__":
    key = jax.random.PRNGKey(0)
    kx, kw, kb, kx2, kw2, kb2 = jax.random.split(key, 6)

    # --- Case 1: FCLayer(32, 64), f32, single-K-tile fast path -------------
    B, cin, cout = 8, 32, 64
    x = jax.random.normal(kx, (B, cin), dtype=jnp.float32)
    bound = 1.0 / (cin ** 0.5)
    w = jax.random.uniform(kw, (cout, cin), jnp.float32, -bound, bound)
    b = jax.random.uniform(kb, (cout,), jnp.float32, -bound, bound)

    params = prepare_fc_params(w, b)            # weight layout hoisted
    out = jax.block_until_ready(fc_layer_apply(x, params))
    ref = jnp.maximum(jnp.dot(x, w.T, precision=lax.Precision.HIGHEST) + b, 0.0)
    assert out.shape == (B, cout)
    assert jnp.allclose(out, ref, atol=1e-5, rtol=1e-5)

    # --- Case 2: unaligned shapes + multi-K accumulator path ---------------
    B2, cin2, cout2 = 48, 256, 200
    x2 = jax.random.normal(kx2, (B2, cin2), dtype=jnp.float32)
    bound2 = 1.0 / (cin2 ** 0.5)
    w2 = jax.random.uniform(kw2, (cout2, cin2), jnp.float32, -bound2, bound2)
    b2 = jax.random.uniform(kb2, (cout2,), jnp.float32, -bound2, bound2)

    params2 = prepare_fc_params(w2, b2, tk_max=128)   # force 2 K steps
    out2 = jax.block_until_ready(fc_layer_apply(x2, params2))
    ref2 = jnp.maximum(
        jnp.dot(x2, w2.T, precision=lax.Precision.HIGHEST) + b2, 0.0)
    assert out2.shape == (B2, cout2)
    assert jnp.allclose(out2, ref2, atol=1e-4, rtol=1e-4)

    # --- Case 3: bf16 compute path (f32 MXU accumulation) ------------------
    params_bf16 = prepare_fc_params(w2, b2, compute_dtype=jnp.bfloat16)
    out_bf16 = jax.block_until_ready(fc_layer_apply(x2, params_bf16))
    ref_bf16 = jnp.maximum(
        jnp.dot(x2.astype(jnp.bfloat16).astype(jnp.float32),
                w2.T.astype(jnp.bfloat16).astype(jnp.float32),
                precision=lax.Precision.HIGHEST) + b2, 0.0)
    assert out_bf16.shape == (B2, cout2)
    assert jnp.allclose(out_bf16, ref_bf16, atol=2e-3, rtol=2e-3)

    print("KERNEL_OK")
</pallas_src>

<mosaic_0001>
module attributes {stable_mosaic.version = 11 : i64} {
  func.func @_fc_relu_kernel_1k(%arg0: i32, %arg1: i32, %arg2: memref<8x128xf32, #tpu.memory_space<vmem>>, %arg3: memref<128x128xf32, #tpu.memory_space<vmem>>, %arg4: memref<1x128xf32, #tpu.memory_space<vmem>>, %arg5: memref<8x128xf32, #tpu.memory_space<vmem>>) attributes {dimension_semantics = [#tpu.dimension_semantics<parallel>, #tpu.dimension_semantics<parallel>], iteration_bounds = array<i64: 1, 1>, scalar_prefetch = 0 : i64, scratch_operands = 0 : i64, tpu.core_type = #tpu.core_type<tc>, window_params = [{transform_indices = @transform_0, window_bounds = array<i64: 8, 128>}, {transform_indices = @transform_1, window_bounds = array<i64: 128, 128>}, {transform_indices = @transform_2, window_bounds = array<i64: 1, 128>}, {transform_indices = @transform_3, window_bounds = array<i64: 8, 128>}]} {
    %c0 = arith.constant 0 : index
    %c0_0 = arith.constant 0 : index
    %0 = vector.load %arg2[%c0, %c0_0] : memref<8x128xf32, #tpu.memory_space<vmem>>, vector<8x128xf32>
    %c0_1 = arith.constant 0 : index
    %c0_2 = arith.constant 0 : index
    %1 = vector.load %arg3[%c0_1, %c0_2] : memref<128x128xf32, #tpu.memory_space<vmem>>, vector<128x128xf32>
    %cst = arith.constant dense<0.000000e+00> : vector<8x128xf32>
    %2 = tpu.matmul %0, %1, %cst {dimension_numbers = #tpu.dot_dimension_numbers<[1], [0], [0], [1], [0, 0, 1, 1], [], []>, precision = #tpu.contract_precision<fp32>} : vector<8x128xf32>, vector<128x128xf32>, vector<8x128xf32> -> vector<8x128xf32>
    %c0_3 = arith.constant 0 : index
    %c0_4 = arith.constant 0 : index
    %3 = vector.load %arg4[%c0_3, %c0_4] : memref<1x128xf32, #tpu.memory_space<vmem>>, vector<1x128xf32>
    %4 = vector.broadcast %3 : vector<1x128xf32> to vector<8x128xf32>
    %5 = arith.addf %2, %4 : vector<8x128xf32>
    %cst_5 = arith.constant 0.000000e+00 : f32
    %6 = vector.broadcast %cst_5 : f32 to vector<8x128xf32>
    %7 = arith.maximumf %5, %6 : vector<8x128xf32>
    %c0_6 = arith.constant 0 : index
    %c0_7 = arith.constant 0 : index
    %8 = vector.load %arg5[%c0_6, %c0_7] : memref<8x128xf32, #tpu.memory_space<vmem>>, vector<8x128xf32>
    tpu.vector_store %arg5[%c0_6, %c0_7], %7 {strides = array<i32>} : memref<8x128xf32, #tpu.memory_space<vmem>>, vector<8x128xf32>,
    return
  }
  func.func @transform_0(%arg0: i32, %arg1: i32) -> (i32, i32) {
    %c0_i32 = arith.constant 0 : i32
    %c0_i32_0 = arith.constant 0 : i32
    return %arg0, %c0_i32 : i32, i32
  }
  func.func @transform_1(%arg0: i32, %arg1: i32) -> (i32, i32) {
    %c0_i32 = arith.constant 0 : i32
    %c0_i32_0 = arith.constant 0 : i32
    return %c0_i32, %arg1 : i32, i32
  }
  func.func @transform_2(%arg0: i32, %arg1: i32) -> (i32, i32) {
    %c0_i32 = arith.constant 0 : i32
    %c0_i32_0 = arith.constant 0 : i32
    return %c0_i32, %arg1 : i32, i32
  }
  func.func @transform_3(%arg0: i32, %arg1: i32) -> (i32, i32) {
    %c0_i32 = arith.constant 0 : i32
    return %arg0, %arg1 : i32, i32
  }
}

</mosaic_0001>

<llo_original>
// kernel: tpu_custom_call.1
$region0: #{tpu_custom_call.1}
  #allocation0 [shape = 'u32[]', space=smem, size = 0x4, offset = 0x4, fixed_abs, tag = 'smem constant byte address 0x4 - core index']
  #allocation1 [shape = 'u32[144,128]{1,0:T(1,128)}', space=vmem, size = 0x12000, scoped, tag = 'internal scratch']
  %s0 = inlined_call_operand.hbm [shape: f32[8,128], index: 0, kind: input, shape index: {}]
  %s1 = inlined_call_operand.hbm [shape: f32[128,128], index: 1, kind: input, shape index: {}]
  %s2 = inlined_call_operand.vmem [shape: f32[1,128], index: 2, kind: input, shape index: {}]
  %s3 = inlined_call_operand.hbm [shape: f32[8,128], index: 3, kind: output, shape index: {}]
  %s4 = sld [smem:[#allocation0]]
  $region30: #{tpu_custom_call.1} parent=0
    _
  %s6 = ssub.s32 1, %s4
  %s7 = scalar_select 0, %s6, %s4
  $region1: #{tpu_custom_call.1} parent=0
    #allocation2 [shape = 'u8[4096]{0}', space=vmem, size = 0x1000, scoped, tag = 'input window, operand 0, single buffered']
    #allocation3 [shape = 's32[1]{0}', space=sflag, size = 0x4, scoped, tag = 'scoped memory for tpu_custom_call.1']
    #allocation4 [shape = 's32[1]{0}', space=sflag, size = 0x4, scoped, tag = 'scoped memory for tpu_custom_call.1']
    #allocation5 [shape = 'u8[65536]{0}', space=vmem, size = 0x10000, scoped, tag = 'input window, operand 1, single buffered']
    #allocation6 [shape = 's32[1]{0}', space=sflag, size = 0x4, scoped, tag = 'scoped memory for tpu_custom_call.1']
    #allocation7 [shape = 'u8[4096]{0}', space=vmem, size = 0x1000, scoped, tag = 'output window, operand 0, single buffered']
    %8 = vsyncpa [#allocation3], 0
    %9 = vsyncpa [#allocation6], 0
    %10 = vsyncpa [#allocation4], 0
    // Predicated region
    $region2: #{tpu_custom_call.1} parent=1 // pred_check
      _
    $region3: #{tpu_custom_call.1} parent=1 // pred_check_branch
      %12 = sbr.rel (0) target = $region5
    $region4: #{tpu_custom_call.1} parent=1 // pred_region
      %s14 = ssub.s32 128, 128
      %15 = vsyncadd [#allocation3], %s14
      %s17 = sshll.u32 [#allocation2], 4
      %s18 = int_to_ptr.vmem [resolvable:$true] %s17
      %20 = dma.hbm_to_vmem [thread:$0]  %s0, 128, %s18, [#allocation3]
    $region5: #{tpu_custom_call.1} parent=1 // pred_fallthru
      _
    // Predicated region
    $region6: #{tpu_custom_call.1} parent=1 // pred_check
      _
    $region7: #{tpu_custom_call.1} parent=1 // pred_check_branch
      %22 = sbr.rel (0) target = $region9
    $region8: #{tpu_custom_call.1} parent=1 // pred_region
      %s24 = ssub.s32 2048, 2048
      %25 = vsyncadd [#allocation6], %s24
      %s26 = sshll.u32 [#allocation5], 4
      %s27 = int_to_ptr.vmem [resolvable:$true] %s26
      %32 = dma.hbm_to_vmem [thread:$0]  %s1, 2048, %s27, [#allocation6], 128, 128, 8
    $region9: #{tpu_custom_call.1} parent=1 // pred_fallthru
      _
    // Predicated region
    $region10: #{tpu_custom_call.1} parent=1 // pred_check
      _
    $region11: #{tpu_custom_call.1} parent=1 // pred_check_branch
      %34 = sbr.rel (0) target = $region13
    $region12: #{tpu_custom_call.1} parent=1 // pred_region
      _
    $region13: #{tpu_custom_call.1} parent=1 // pred_fallthru
      _
    // Predicated region
    $region14: #{tpu_custom_call.1} parent=1 // pred_check
      _
    $region15: #{tpu_custom_call.1} parent=1 // pred_check_branch
      %36 = sbr.rel (0) target = $region17
    $region16: #{tpu_custom_call.1} parent=1 // pred_region
      %37 = dma.done [#allocation3], 128
    $region17: #{tpu_custom_call.1} parent=1 // pred_fallthru
      _
    // Predicated region
    $region18: #{tpu_custom_call.1} parent=1 // pred_check
      _
    $region19: #{tpu_custom_call.1} parent=1 // pred_check_branch
      %39 = sbr.rel (0) target = $region21
    $region20: #{tpu_custom_call.1} parent=1 // pred_region
      %40 = dma.done [#allocation6], 2048
    $region21: #{tpu_custom_call.1} parent=1 // pred_fallthru
      _
    %v41 = vld [vmem:[#allocation2] sm:$0xff]
    %v42 = vld [vmem:[#allocation5] sm:$0xff]
    %v43 = vld [vmem:[#allocation5 + $0x8] sm:$0xff]
    %v44 = vld [vmem:[#allocation5 + $0x10] sm:$0xff]
    %v45 = vld [vmem:[#allocation5 + $0x18] sm:$0xff]
    %v46 = vld [vmem:[#allocation5 + $0x20] sm:$0xff]
    %v47 = vld [vmem:[#allocation5 + $0x28] sm:$0xff]
    %v48 = vld [vmem:[#allocation5 + $0x30] sm:$0xff]
    %v49 = vld [vmem:[#allocation5 + $0x38] sm:$0xff]
    %v50 = vld [vmem:[#allocation5 + $0x40] sm:$0xff]
    %v51 = vld [vmem:[#allocation5 + $0x48] sm:$0xff]
    %v52 = vld [vmem:[#allocation5 + $0x50] sm:$0xff]
    %v53 = vld [vmem:[#allocation5 + $0x58] sm:$0xff]
    %v54 = vld [vmem:[#allocation5 + $0x60] sm:$0xff]
    %v55 = vld [vmem:[#allocation5 + $0x68] sm:$0xff]
    %v56 = vld [vmem:[#allocation5 + $0x70] sm:$0xff]
    %v57 = vld [vmem:[#allocation5 + $0x78] sm:$0xff]
    %v58 = vld [vmem:[%s2] sm:$0x1]
    %v60 = vlaneseq
    %v61 = vshrl.u32 %v60, 7
    %v62 = vsub.s32 0, %v61
    %v63 = vrot.slane %v58, %v62
    %65 = vmatprep.subr.mxu0 0.0
    %v66 = vand.u32 %v57, 4294901760
    %67 = vmatpush1.msra.mxu0 %v66
    %68 = vmatprep.subr.mxu0 0.0
    %v69 = vand.u32 %v56, 4294901760
    %70 = vmatpush1.msra.mxu0 %v69
    %71 = vmatprep.subr.mxu0 0.0
    %v72 = vand.u32 %v55, 4294901760
    %73 = vmatpush1.msra.mxu0 %v72
    %74 = vmatprep.subr.mxu0 0.0
    %v75 = vand.u32 %v54, 4294901760
    %76 = vmatpush1.msra.mxu0 %v75
    %77 = vmatprep.subr.mxu0 0.0
    %v78 = vand.u32 %v53, 4294901760
    %79 = vmatpush1.msra.mxu0 %v78
    %80 = vmatprep.subr.mxu0 0.0
    %v81 = vand.u32 %v52, 4294901760
    %82 = vmatpush1.msra.mxu0 %v81
    %83 = vmatprep.subr.mxu0 0.0
    %v84 = vand.u32 %v51, 4294901760
    %85 = vmatpush1.msra.mxu0 %v84
    %86 = vmatprep.subr.mxu0 0.0
    %v87 = vand.u32 %v50, 4294901760
    %88 = vmatpush1.msra.mxu0 %v87
    %89 = vmatprep.subr.mxu0 0.0
    %v90 = vand.u32 %v49, 4294901760
    %91 = vmatpush1.msra.mxu0 %v90
    %92 = vmatprep.subr.mxu0 0.0
    %v93 = vand.u32 %v48, 4294901760
    %94 = vmatpush1.msra.mxu0 %v93
    %95 = vmatprep.subr.mxu0 0.0
    %v96 = vand.u32 %v47, 4294901760
    %97 = vmatpush1.msra.mxu0 %v96
    %98 = vmatprep.subr.mxu0 0.0
    %v99 = vand.u32 %v46, 4294901760
    %100 = vmatpush1.msra.mxu0 %v99
    %101 = vmatprep.subr.mxu0 0.0
    %v102 = vand.u32 %v45, 4294901760
    %103 = vmatpush1.msra.mxu0 %v102
    %104 = vmatprep.subr.mxu0 0.0
    %v105 = vand.u32 %v44, 4294901760
    %106 = vmatpush1.msra.mxu0 %v105
    %107 = vmatprep.subr.mxu0 0.0
    %v108 = vand.u32 %v43, 4294901760
    %109 = vmatpush1.msra.mxu0 %v108
    %110 = vmatprep.subr.mxu0 0.0
    %v111 = vand.u32 %v42, 4294901760
    %112 = vmatpush1.msra.mxu0 %v111
    %113 = vmatprep.subr.mxu0 0.0
    %114 = vmatpush2.msra.mxu0 0.0
    %115 = vmatprep.subr.mxu0 0.0
    %116 = vmatpush2.msra.mxu0 0.0
    %117 = vmatprep.subr.mxu0 0.0
    %118 = vmatpush2.msra.mxu0 0.0
    %119 = vmatprep.subr.mxu0 0.0
    %120 = vmatpush2.msra.mxu0 0.0
    %121 = vmatprep.subr.mxu0 0.0
    %122 = vmatpush2.msra.mxu0 0.0
    %123 = vmatprep.subr.mxu0 0.0
    %124 = vmatpush2.msra.mxu0 0.0
    %125 = vmatprep.subr.mxu0 0.0
    %126 = vmatpush2.msra.mxu0 0.0
    %127 = vmatprep.subr.mxu0 0.0
    %128 = vmatpush2.msra.mxu0 0.0
    %129 = vmatprep.subr.mxu0 0.0
    %130 = vmatpush2.msra.mxu0 0.0
    %131 = vmatprep.subr.mxu0 0.0
    %132 = vmatpush2.msra.mxu0 0.0
    %133 = vmatprep.subr.mxu0 0.0
    %134 = vmatpush2.msra.mxu0 0.0
    %135 = vmatprep.subr.mxu0 0.0
    %136 = vmatpush2.msra.mxu0 0.0
    %137 = vmatprep.subr.mxu0 0.0
    %138 = vmatpush2.msra.mxu0 0.0
    %139 = vmatprep.subr.mxu0 0.0
    %140 = vmatpush2.msra.mxu0 0.0
    %141 = vmatprep.subr.mxu0 0.0
    %142 = vmatpush2.msra.mxu0 0.0
    %143 = vmatprep.subr.mxu0 0.0
    %144 = vmatpush2.msra.mxu0 0.0
    %145 = vmatprep.mubr.f32.mxu0 0.0
    %v146 = vand.u32 %v41, 4294901760
    %v147 = vsub.f32 %v41, %v146
    %v148 = vand.u32 %v147, 4294901760
    %v149 = vsub.f32 %v147, %v148
    %v150 = vand.u32 %v149, 4294901760
    %151 = vmatmul.mubr.f32.gmra.mxu0 %v150
    %v152 = vpop.f32.mrf.mxu0
    %v153 = vadd.f32 %v63, %v152
    %v154 = vpop.f32.mrf.mxu0
    %155 = vdwg.mxu0
    %156 = vmatprep.subr.mxu0 0.0
    %v157 = vand.u32 %v57, 4294901760
    %v158 = vsub.f32 %v57, %v157
    %v159 = vand.u32 %v158, 4294901760
    %v160 = vsub.f32 %v158, %v159
    %v161 = vand.u32 %v160, 4294901760
    %162 = vmatpush1.msra.mxu0 %v161
    %163 = vmatprep.subr.mxu0 0.0
    %v164 = vand.u32 %v56, 4294901760
    %v165 = vsub.f32 %v56, %v164
    %v166 = vand.u32 %v165, 4294901760
    %v167 = vsub.f32 %v165, %v166
    %v168 = vand.u32 %v167, 4294901760
    %169 = vmatpush1.msra.mxu0 %v168
    %170 = vmatprep.subr.mxu0 0.0
    %v171 = vand.u32 %v55, 4294901760
    %v172 = vsub.f32 %v55, %v171
    %v173 = vand.u32 %v172, 4294901760
    %v174 = vsub.f32 %v172, %v173
    %v175 = vand.u32 %v174, 4294901760
    %176 = vmatpush1.msra.mxu0 %v175
    %177 = vmatprep.subr.mxu0 0.0
    %v178 = vand.u32 %v54, 4294901760
    %v179 = vsub.f32 %v54, %v178
    %v180 = vand.u32 %v179, 4294901760
    %v181 = vsub.f32 %v179, %v180
    %v182 = vand.u32 %v181, 4294901760
    %183 = vmatpush1.msra.mxu0 %v182
    %184 = vmatprep.subr.mxu0 0.0
    %v185 = vand.u32 %v53, 4294901760
    %v186 = vsub.f32 %v53, %v185
    %v187 = vand.u32 %v186, 4294901760
    %v188 = vsub.f32 %v186, %v187
    %v189 = vand.u32 %v188, 4294901760
    %190 = vmatpush1.msra.mxu0 %v189
    %191 = vmatprep.subr.mxu0 0.0
    %v192 = vand.u32 %v52, 4294901760
    %v193 = vsub.f32 %v52, %v192
    %v194 = vand.u32 %v193, 4294901760
    %v195 = vsub.f32 %v193, %v194
    %v196 = vand.u32 %v195, 4294901760
    %197 = vmatpush1.msra.mxu0 %v196
    %198 = vmatprep.subr.mxu0 0.0
    %v199 = vand.u32 %v51, 4294901760
    %v200 = vsub.f32 %v51, %v199
    %v201 = vand.u32 %v200, 4294901760
    %v202 = vsub.f32 %v200, %v201
    %v203 = vand.u32 %v202, 4294901760
    %204 = vmatpush1.msra.mxu0 %v203
    %205 = vmatprep.subr.mxu0 0.0
    %v206 = vand.u32 %v50, 4294901760
    %v207 = vsub.f32 %v50, %v206
    %v208 = vand.u32 %v207, 4294901760
    %v209 = vsub.f32 %v207, %v208
    %v210 = vand.u32 %v209, 4294901760
    %211 = vmatpush1.msra.mxu0 %v210
    %212 = vmatprep.subr.mxu0 0.0
    %v213 = vand.u32 %v49, 4294901760
    %v214 = vsub.f32 %v49, %v213
    %v215 = vand.u32 %v214, 4294901760
    %v216 = vsub.f32 %v214, %v215
    %v217 = vand.u32 %v216, 4294901760
    %218 = vmatpush1.msra.mxu0 %v217
    %219 = vmatprep.subr.mxu0 0.0
    %v220 = vand.u32 %v48, 4294901760
    %v221 = vsub.f32 %v48, %v220
    %v222 = vand.u32 %v221, 4294901760
    %v223 = vsub.f32 %v221, %v222
    %v224 = vand.u32 %v223, 4294901760
    %225 = vmatpush1.msra.mxu0 %v224
    %226 = vmatprep.subr.mxu0 0.0
    %v227 = vand.u32 %v47, 4294901760
    %v228 = vsub.f32 %v47, %v227
    %v229 = vand.u32 %v228, 4294901760
    %v230 = vsub.f32 %v228, %v229
    %v231 = vand.u32 %v230, 4294901760
    %232 = vmatpush1.msra.mxu0 %v231
    %233 = vmatprep.subr.mxu0 0.0
    %v234 = vand.u32 %v46, 4294901760
    %v235 = vsub.f32 %v46, %v234
    %v236 = vand.u32 %v235, 4294901760
    %v237 = vsub.f32 %v235, %v236
    %v238 = vand.u32 %v237, 4294901760
    %239 = vmatpush1.msra.mxu0 %v238
    %240 = vmatprep.subr.mxu0 0.0
    %v241 = vand.u32 %v45, 4294901760
    %v242 = vsub.f32 %v45, %v241
    %v243 = vand.u32 %v242, 4294901760
    %v244 = vsub.f32 %v242, %v243
    %v245 = vand.u32 %v244, 4294901760
    %246 = vmatpush1.msra.mxu0 %v245
    %247 = vmatprep.subr.mxu0 0.0
    %v248 = vand.u32 %v44, 4294901760
    %v249 = vsub.f32 %v44, %v248
    %v250 = vand.u32 %v249, 4294901760
    %v251 = vsub.f32 %v249, %v250
    %v252 = vand.u32 %v251, 4294901760
    %253 = vmatpush1.msra.mxu0 %v252
    %254 = vmatprep.subr.mxu0 0.0
    %v255 = vand.u32 %v43, 4294901760
    %v256 = vsub.f32 %v43, %v255
    %v257 = vand.u32 %v256, 4294901760
    %v258 = vsub.f32 %v256, %v257
    %v259 = vand.u32 %v258, 4294901760
    %260 = vmatpush1.msra.mxu0 %v259
    %261 = vmatprep.subr.mxu0 0.0
    %v262 = vand.u32 %v42, 4294901760
    %v263 = vsub.f32 %v42, %v262
    %v264 = vand.u32 %v263, 4294901760
    %v265 = vsub.f32 %v263, %v264
    %v266 = vand.u32 %v265, 4294901760
    %267 = vmatpush1.msra.mxu0 %v266
    %268 = vmatprep.subr.mxu0 0.0
    %269 = vmatpush2.msra.mxu0 0.0
    %270 = vmatprep.subr.mxu0 0.0
    %271 = vmatpush2.msra.mxu0 0.0
    %272 = vmatprep.subr.mxu0 0.0
    %273 = vmatpush2.msra.mxu0 0.0
    %274 = vmatprep.subr.mxu0 0.0
    %275 = vmatpush2.msra.mxu0 0.0
    %276 = vmatprep.subr.mxu0 0.0
    %277 = vmatpush2.msra.mxu0 0.0
    %278 = vmatprep.subr.mxu0 0.0
    %279 = vmatpush2.msra.mxu0 0.0
    %280 = vmatprep.subr.mxu0 0.0
    %281 = vmatpush2.msra.mxu0 0.0
    %282 = vmatprep.subr.mxu0 0.0
    %283 = vmatpush2.msra.mxu0 0.0
    %284 = vmatprep.subr.mxu0 0.0
    %285 = vmatpush2.msra.mxu0 0.0
    %286 = vmatprep.subr.mxu0 0.0
    %287 = vmatpush2.msra.mxu0 0.0
    %288 = vmatprep.subr.mxu0 0.0
    %289 = vmatpush2.msra.mxu0 0.0
    %290 = vmatprep.subr.mxu0 0.0
    %291 = vmatpush2.msra.mxu0 0.0
    %292 = vmatprep.subr.mxu0 0.0
    %293 = vmatpush2.msra.mxu0 0.0
    %294 = vmatprep.subr.mxu0 0.0
    %295 = vmatpush2.msra.mxu0 0.0
    %296 = vmatprep.subr.mxu0 0.0
    %297 = vmatpush2.msra.mxu0 0.0
    %298 = vmatprep.subr.mxu0 0.0
    %299 = vmatpush2.msra.mxu0 0.0
    %300 = vmatprep.mubr.f32.mxu0 0.0
    %v301 = vand.u32 %v41, 4294901760
    %302 = vmatmul.mubr.f32.gmra.mxu0 %v301
    %v303 = vpop.f32.mrf.mxu0
    %v304 = vadd.f32 %v153, %v303
    %v305 = vpop.f32.mrf.mxu0
    %306 = vdwg.mxu0
    %307 = vmatprep.subr.mxu0 0.0
    %v308 = vand.u32 %v57, 4294901760
    %v309 = vsub.f32 %v57, %v308
    %310 = vmatpush1.msra.mxu0 %v309
    %311 = vmatprep.subr.mxu0 0.0
    %v312 = vand.u32 %v56, 4294901760
    %v313 = vsub.f32 %v56, %v312
    %314 = vmatpush1.msra.mxu0 %v313
    %315 = vmatprep.subr.mxu0 0.0
    %v316 = vand.u32 %v55, 4294901760
    %v317 = vsub.f32 %v55, %v316
    %318 = vmatpush1.msra.mxu0 %v317
    %319 = vmatprep.subr.mxu0 0.0
    %v320 = vand.u32 %v54, 4294901760
    %v321 = vsub.f32 %v54, %v320
    %322 = vmatpush1.msra.mxu0 %v321
    %323 = vmatprep.subr.mxu0 0.0
    %v324 = vand.u32 %v53, 4294901760
    %v325 = vsub.f32 %v53, %v324
    %326 = vmatpush1.msra.mxu0 %v325
    %327 = vmatprep.subr.mxu0 0.0
    %v328 = vand.u32 %v52, 4294901760
    %v329 = vsub.f32 %v52, %v328
    %330 = vmatpush1.msra.mxu0 %v329
    %331 = vmatprep.subr.mxu0 0.0
    %v332 = vand.u32 %v51, 4294901760
    %v333 = vsub.f32 %v51, %v332
    %334 = vmatpush1.msra.mxu0 %v333
    %335 = vmatprep.subr.mxu0 0.0
    %v336 = vand.u32 %v50, 4294901760
    %v337 = vsub.f32 %v50, %v336
    %338 = vmatpush1.msra.mxu0 %v337
    %339 = vmatprep.subr.mxu0 0.0
    %v340 = vand.u32 %v49, 4294901760
    %v341 = vsub.f32 %v49, %v340
    %342 = vmatpush1.msra.mxu0 %v341
    %343 = vmatprep.subr.mxu0 0.0
    %v344 = vand.u32 %v48, 4294901760
    %v345 = vsub.f32 %v48, %v344
    %346 = vmatpush1.msra.mxu0 %v345
    %347 = vmatprep.subr.mxu0 0.0
    %v348 = vand.u32 %v47, 4294901760
    %v349 = vsub.f32 %v47, %v348
    %350 = vmatpush1.msra.mxu0 %v349
    %351 = vmatprep.subr.mxu0 0.0
    %v352 = vand.u32 %v46, 4294901760
    %v353 = vsub.f32 %v46, %v352
    %354 = vmatpush1.msra.mxu0 %v353
    %355 = vmatprep.subr.mxu0 0.0
    %v356 = vand.u32 %v45, 4294901760
    %v357 = vsub.f32 %v45, %v356
    %358 = vmatpush1.msra.mxu0 %v357
    %359 = vmatprep.subr.mxu0 0.0
    %v360 = vand.u32 %v44, 4294901760
    %v361 = vsub.f32 %v44, %v360
    %362 = vmatpush1.msra.mxu0 %v361
    %363 = vmatprep.subr.mxu0 0.0
    %v364 = vand.u32 %v43, 4294901760
    %v365 = vsub.f32 %v43, %v364
    %366 = vmatpush1.msra.mxu0 %v365
    %367 = vmatprep.subr.mxu0 0.0
    %v368 = vand.u32 %v42, 4294901760
    %v369 = vsub.f32 %v42, %v368
    %370 = vmatpush1.msra.mxu0 %v369
    %371 = vmatprep.subr.mxu0 0.0
    %372 = vmatpush2.msra.mxu0 0.0
    %373 = vmatprep.subr.mxu0 0.0
    %374 = vmatpush2.msra.mxu0 0.0
    %375 = vmatprep.subr.mxu0 0.0
    %376 = vmatpush2.msra.mxu0 0.0
    %377 = vmatprep.subr.mxu0 0.0
    %378 = vmatpush2.msra.mxu0 0.0
    %379 = vmatprep.subr.mxu0 0.0
    %380 = vmatpush2.msra.mxu0 0.0
    %381 = vmatprep.subr.mxu0 0.0
    %382 = vmatpush2.msra.mxu0 0.0
    %383 = vmatprep.subr.mxu0 0.0
    %384 = vmatpush2.msra.mxu0 0.0
    %385 = vmatprep.subr.mxu0 0.0
    %386 = vmatpush2.msra.mxu0 0.0
    %387 = vmatprep.subr.mxu0 0.0
    %388 = vmatpush2.msra.mxu0 0.0
    %389 = vmatprep.subr.mxu0 0.0
    %390 = vmatpush2.msra.mxu0 0.0
    %391 = vmatprep.subr.mxu0 0.0
    %392 = vmatpush2.msra.mxu0 0.0
    %393 = vmatprep.subr.mxu0 0.0
    %394 = vmatpush2.msra.mxu0 0.0
    %395 = vmatprep.subr.mxu0 0.0
    %396 = vmatpush2.msra.mxu0 0.0
    %397 = vmatprep.subr.mxu0 0.0
    %398 = vmatpush2.msra.mxu0 0.0
    %399 = vmatprep.subr.mxu0 0.0
    %400 = vmatpush2.msra.mxu0 0.0
    %401 = vmatprep.subr.mxu0 0.0
    %402 = vmatpush2.msra.mxu0 0.0
    %403 = vmatprep.mubr.f32.mxu0 0.0
    %v404 = vand.u32 %v41, 4294901760
    %v405 = vsub.f32 %v41, %v404
    %406 = vmatmul.mubr.f32.gmra.mxu0 %v405
    %v407 = vpop.f32.mrf.mxu0
    %v408 = vadd.f32 %v304, %v407
    %v409 = vpop.f32.mrf.mxu0
    %410 = vdwg.mxu0
    %411 = vmatprep.subr.mxu0 0.0
    %v412 = vand.u32 %v57, 4294901760
    %413 = vmatpush1.msra.mxu0 %v412
    %414 = vmatprep.subr.mxu0 0.0
    %v415 = vand.u32 %v56, 4294901760
    %416 = vmatpush1.msra.mxu0 %v415
    %417 = vmatprep.subr.mxu0 0.0
    %v418 = vand.u32 %v55, 4294901760
    %419 = vmatpush1.msra.mxu0 %v418
    %420 = vmatprep.subr.mxu0 0.0
    %v421 = vand.u32 %v54, 4294901760
    %422 = vmatpush1.msra.mxu0 %v421
    %423 = vmatprep.subr.mxu0 0.0
    %v424 = vand.u32 %v53, 4294901760
    %425 = vmatpush1.msra.mxu0 %v424
    %426 = vmatprep.subr.mxu0 0.0
    %v427 = vand.u32 %v52, 4294901760
    %428 = vmatpush1.msra.mxu0 %v427
    %429 = vmatprep.subr.mxu0 0.0
    %v430 = vand.u32 %v51, 4294901760
    %431 = vmatpush1.msra.mxu0 %v430
    %432 = vmatprep.subr.mxu0 0.0
    %v433 = vand.u32 %v50, 4294901760
    %434 = vmatpush1.msra.mxu0 %v433
    %435 = vmatprep.subr.mxu0 0.0
    %v436 = vand.u32 %v49, 4294901760
    %437 = vmatpush1.msra.mxu0 %v436
    %438 = vmatprep.subr.mxu0 0.0
    %v439 = vand.u32 %v48, 4294901760
    %440 = vmatpush1.msra.mxu0 %v439
    %441 = vmatprep.subr.mxu0 0.0
    %v442 = vand.u32 %v47, 4294901760
    %443 = vmatpush1.msra.mxu0 %v442
    %444 = vmatprep.subr.mxu0 0.0
    %v445 = vand.u32 %v46, 4294901760
    %446 = vmatpush1.msra.mxu0 %v445
    %447 = vmatprep.subr.mxu0 0.0
    %v448 = vand.u32 %v45, 4294901760
    %449 = vmatpush1.msra.mxu0 %v448
    %450 = vmatprep.subr.mxu0 0.0
    %v451 = vand.u32 %v44, 4294901760
    %452 = vmatpush1.msra.mxu0 %v451
    %453 = vmatprep.subr.mxu0 0.0
    %v454 = vand.u32 %v43, 4294901760
    %455 = vmatpush1.msra.mxu0 %v454
    %456 = vmatprep.subr.mxu0 0.0
    %v457 = vand.u32 %v42, 4294901760
    %458 = vmatpush1.msra.mxu0 %v457
    %459 = vmatprep.subr.mxu0 0.0
    %460 = vmatpush2.msra.mxu0 0.0
    %461 = vmatprep.subr.mxu0 0.0
    %462 = vmatpush2.msra.mxu0 0.0
    %463 = vmatprep.subr.mxu0 0.0
    %464 = vmatpush2.msra.mxu0 0.0
    %465 = vmatprep.subr.mxu0 0.0
    %466 = vmatpush2.msra.mxu0 0.0
    %467 = vmatprep.subr.mxu0 0.0
    %468 = vmatpush2.msra.mxu0 0.0
    %469 = vmatprep.subr.mxu0 0.0
    %470 = vmatpush2.msra.mxu0 0.0
    %471 = vmatprep.subr.mxu0 0.0
    %472 = vmatpush2.msra.mxu0 0.0
    %473 = vmatprep.subr.mxu0 0.0
    %474 = vmatpush2.msra.mxu0 0.0
    %475 = vmatprep.subr.mxu0 0.0
    %476 = vmatpush2.msra.mxu0 0.0
    %477 = vmatprep.subr.mxu0 0.0
    %478 = vmatpush2.msra.mxu0 0.0
    %479 = vmatprep.subr.mxu0 0.0
    %480 = vmatpush2.msra.mxu0 0.0
    %481 = vmatprep.subr.mxu0 0.0
    %482 = vmatpush2.msra.mxu0 0.0
    %483 = vmatprep.subr.mxu0 0.0
    %484 = vmatpush2.msra.mxu0 0.0
    %485 = vmatprep.subr.mxu0 0.0
    %486 = vmatpush2.msra.mxu0 0.0
    %487 = vmatprep.subr.mxu0 0.0
    %488 = vmatpush2.msra.mxu0 0.0
    %489 = vmatprep.subr.mxu0 0.0
    %490 = vmatpush2.msra.mxu0 0.0
    %491 = vmatprep.mubr.f32.mxu0 0.0
    %v492 = vand.u32 %v41, 4294901760
    %v493 = vsub.f32 %v41, %v492
    %v494 = vand.u32 %v493, 4294901760
    %495 = vmatmul.mubr.f32.gmra.mxu0 %v494
    %v496 = vpop.f32.mrf.mxu0
    %v497 = vadd.f32 %v408, %v496
    %v498 = vpop.f32.mrf.mxu0
    %499 = vdwg.mxu0
    %500 = vmatprep.subr.mxu0 0.0
    %v501 = vand.u32 %v57, 4294901760
    %v502 = vsub.f32 %v57, %v501
    %v503 = vand.u32 %v502, 4294901760
    %504 = vmatpush1.msra.mxu0 %v503
    %505 = vmatprep.subr.mxu0 0.0
    %v506 = vand.u32 %v56, 4294901760
    %v507 = vsub.f32 %v56, %v506
    %v508 = vand.u32 %v507, 4294901760
    %509 = vmatpush1.msra.mxu0 %v508
    %510 = vmatprep.subr.mxu0 0.0
    %v511 = vand.u32 %v55, 4294901760
    %v512 = vsub.f32 %v55, %v511
    %v513 = vand.u32 %v512, 4294901760
    %514 = vmatpush1.msra.mxu0 %v513
    %515 = vmatprep.subr.mxu0 0.0
    %v516 = vand.u32 %v54, 4294901760
    %v517 = vsub.f32 %v54, %v516
    %v518 = vand.u32 %v517, 4294901760
    %519 = vmatpush1.msra.mxu0 %v518
    %520 = vmatprep.subr.mxu0 0.0
    %v521 = vand.u32 %v53, 4294901760
    %v522 = vsub.f32 %v53, %v521
    %v523 = vand.u32 %v522, 4294901760
    %524 = vmatpush1.msra.mxu0 %v523
    %525 = vmatprep.subr.mxu0 0.0
    %v526 = vand.u32 %v52, 4294901760
    %v527 = vsub.f32 %v52, %v526
    %v528 = vand.u32 %v527, 4294901760
    %529 = vmatpush1.msra.mxu0 %v528
    %530 = vmatprep.subr.mxu0 0.0
    %v531 = vand.u32 %v51, 4294901760
    %v532 = vsub.f32 %v51, %v531
    %v533 = vand.u32 %v532, 4294901760
    %534 = vmatpush1.msra.mxu0 %v533
    %535 = vmatprep.subr.mxu0 0.0
    %v536 = vand.u32 %v50, 4294901760
    %v537 = vsub.f32 %v50, %v536
    %v538 = vand.u32 %v537, 4294901760
    %539 = vmatpush1.msra.mxu0 %v538
    %540 = vmatprep.subr.mxu0 0.0
    %v541 = vand.u32 %v49, 4294901760
    %v542 = vsub.f32 %v49, %v541
    %v543 = vand.u32 %v542, 4294901760
    %544 = vmatpush1.msra.mxu0 %v543
    %545 = vmatprep.subr.mxu0 0.0
    %v546 = vand.u32 %v48, 4294901760
    %v547 = vsub.f32 %v48, %v546
    %v548 = vand.u32 %v547, 4294901760
    %549 = vmatpush1.msra.mxu0 %v548
    %550 = vmatprep.subr.mxu0 0.0
    %v551 = vand.u32 %v47, 4294901760
    %v552 = vsub.f32 %v47, %v551
    %v553 = vand.u32 %v552, 4294901760
    %554 = vmatpush1.msra.mxu0 %v553
    %555 = vmatprep.subr.mxu0 0.0
    %v556 = vand.u32 %v46, 4294901760
    %v557 = vsub.f32 %v46, %v556
    %v558 = vand.u32 %v557, 4294901760
    %559 = vmatpush1.msra.mxu0 %v558
    %560 = vmatprep.subr.mxu0 0.0
    %v561 = vand.u32 %v45, 4294901760
    %v562 = vsub.f32 %v45, %v561
    %v563 = vand.u32 %v562, 4294901760
    %564 = vmatpush1.msra.mxu0 %v563
    %565 = vmatprep.subr.mxu0 0.0
    %v566 = vand.u32 %v44, 4294901760
    %v567 = vsub.f32 %v44, %v566
    %v568 = vand.u32 %v567, 4294901760
    %569 = vmatpush1.msra.mxu0 %v568
    %570 = vmatprep.subr.mxu0 0.0
    %v571 = vand.u32 %v43, 4294901760
    %v572 = vsub.f32 %v43, %v571
    %v573 = vand.u32 %v572, 4294901760
    %574 = vmatpush1.msra.mxu0 %v573
    %575 = vmatprep.subr.mxu0 0.0
    %v576 = vand.u32 %v42, 4294901760
    %v577 = vsub.f32 %v42, %v576
    %v578 = vand.u32 %v577, 4294901760
    %579 = vmatpush1.msra.mxu0 %v578
    %580 = vmatprep.subr.mxu0 0.0
    %581 = vmatpush2.msra.mxu0 0.0
    %582 = vmatprep.subr.mxu0 0.0
    %583 = vmatpush2.msra.mxu0 0.0
    %584 = vmatprep.subr.mxu0 0.0
    %585 = vmatpush2.msra.mxu0 0.0
    %586 = vmatprep.subr.mxu0 0.0
    %587 = vmatpush2.msra.mxu0 0.0
    %588 = vmatprep.subr.mxu0 0.0
    %589 = vmatpush2.msra.mxu0 0.0
    %590 = vmatprep.subr.mxu0 0.0
    %591 = vmatpush2.msra.mxu0 0.0
    %592 = vmatprep.subr.mxu0 0.0
    %593 = vmatpush2.msra.mxu0 0.0
    %594 = vmatprep.subr.mxu0 0.0
    %595 = vmatpush2.msra.mxu0 0.0
    %596 = vmatprep.subr.mxu0 0.0
    %597 = vmatpush2.msra.mxu0 0.0
    %598 = vmatprep.subr.mxu0 0.0
    %599 = vmatpush2.msra.mxu0 0.0
    %600 = vmatprep.subr.mxu0 0.0
    %601 = vmatpush2.msra.mxu0 0.0
    %602 = vmatprep.subr.mxu0 0.0
    %603 = vmatpush2.msra.mxu0 0.0
    %604 = vmatprep.subr.mxu0 0.0
    %605 = vmatpush2.msra.mxu0 0.0
    %606 = vmatprep.subr.mxu0 0.0
    %607 = vmatpush2.msra.mxu0 0.0
    %608 = vmatprep.subr.mxu0 0.0
    %609 = vmatpush2.msra.mxu0 0.0
    %610 = vmatprep.subr.mxu0 0.0
    %611 = vmatpush2.msra.mxu0 0.0
    %612 = vmatprep.mubr.f32.mxu0 0.0
    %v613 = vand.u32 %v41, 4294901760
    %614 = vmatmul.mubr.f32.gmra.mxu0 %v613
    %v615 = vpop.f32.mrf.mxu0
    %v616 = vadd.f32 %v497, %v615
    %v617 = vpop.f32.mrf.mxu0
    %618 = vdwg.mxu0
    %619 = vmatprep.subr.mxu0 0.0
    %v620 = vand.u32 %v57, 4294901760
    %621 = vmatpush1.msra.mxu0 %v620
    %622 = vmatprep.subr.mxu0 0.0
    %v623 = vand.u32 %v56, 4294901760
    %624 = vmatpush1.msra.mxu0 %v623
    %625 = vmatprep.subr.mxu0 0.0
    %v626 = vand.u32 %v55, 4294901760
    %627 = vmatpush1.msra.mxu0 %v626
    %628 = vmatprep.subr.mxu0 0.0
    %v629 = vand.u32 %v54, 4294901760
    %630 = vmatpush1.msra.mxu0 %v629
    %631 = vmatprep.subr.mxu0 0.0
    %v632 = vand.u32 %v53, 4294901760
    %633 = vmatpush1.msra.mxu0 %v632
    %634 = vmatprep.subr.mxu0 0.0
    %v635 = vand.u32 %v52, 4294901760
    %636 = vmatpush1.msra.mxu0 %v635
    %637 = vmatprep.subr.mxu0 0.0
    %v638 = vand.u32 %v51, 4294901760
    %639 = vmatpush1.msra.mxu0 %v638
    %640 = vmatprep.subr.mxu0 0.0
    %v641 = vand.u32 %v50, 4294901760
    %642 = vmatpush1.msra.mxu0 %v641
    %643 = vmatprep.subr.mxu0 0.0
    %v644 = vand.u32 %v49, 4294901760
    %645 = vmatpush1.msra.mxu0 %v644
    %646 = vmatprep.subr.mxu0 0.0
    %v647 = vand.u32 %v48, 4294901760
    %648 = vmatpush1.msra.mxu0 %v647
    %649 = vmatprep.subr.mxu0 0.0
    %v650 = vand.u32 %v47, 4294901760
    %651 = vmatpush1.msra.mxu0 %v650
    %652 = vmatprep.subr.mxu0 0.0
    %v653 = vand.u32 %v46, 4294901760
    %654 = vmatpush1.msra.mxu0 %v653
    %655 = vmatprep.subr.mxu0 0.0
    %v656 = vand.u32 %v45, 4294901760
    %657 = vmatpush1.msra.mxu0 %v656
    %658 = vmatprep.subr.mxu0 0.0
    %v659 = vand.u32 %v44, 4294901760
    %660 = vmatpush1.msra.mxu0 %v659
    %661 = vmatprep.subr.mxu0 0.0
    %v662 = vand.u32 %v43, 4294901760
    %663 = vmatpush1.msra.mxu0 %v662
    %664 = vmatprep.subr.mxu0 0.0
    %v665 = vand.u32 %v42, 4294901760
    %666 = vmatpush1.msra.mxu0 %v665
    %667 = vmatprep.subr.mxu0 0.0
    %668 = vmatpush2.msra.mxu0 0.0
    %669 = vmatprep.subr.mxu0 0.0
    %670 = vmatpush2.msra.mxu0 0.0
    %671 = vmatprep.subr.mxu0 0.0
    %672 = vmatpush2.msra.mxu0 0.0
    %673 = vmatprep.subr.mxu0 0.0
    %674 = vmatpush2.msra.mxu0 0.0
    %675 = vmatprep.subr.mxu0 0.0
    %676 = vmatpush2.msra.mxu0 0.0
    %677 = vmatprep.subr.mxu0 0.0
    %678 = vmatpush2.msra.mxu0 0.0
    %679 = vmatprep.subr.mxu0 0.0
    %680 = vmatpush2.msra.mxu0 0.0
    %681 = vmatprep.subr.mxu0 0.0
    %682 = vmatpush2.msra.mxu0 0.0
    %683 = vmatprep.subr.mxu0 0.0
    %684 = vmatpush2.msra.mxu0 0.0
    %685 = vmatprep.subr.mxu0 0.0
    %686 = vmatpush2.msra.mxu0 0.0
    %687 = vmatprep.subr.mxu0 0.0
    %688 = vmatpush2.msra.mxu0 0.0
    %689 = vmatprep.subr.mxu0 0.0
    %690 = vmatpush2.msra.mxu0 0.0
    %691 = vmatprep.subr.mxu0 0.0
    %692 = vmatpush2.msra.mxu0 0.0
    %693 = vmatprep.subr.mxu0 0.0
    %694 = vmatpush2.msra.mxu0 0.0
    %695 = vmatprep.subr.mxu0 0.0
    %696 = vmatpush2.msra.mxu0 0.0
    %697 = vmatprep.subr.mxu0 0.0
    %698 = vmatpush2.msra.mxu0 0.0
    %699 = vmatprep.mubr.f32.mxu0 0.0
    %v700 = vand.u32 %v41, 4294901760
    %701 = vmatmul.mubr.f32.gmra.mxu0 %v700
    %v702 = vpop.f32.mrf.mxu0
    %v703 = vadd.f32 %v616, %v702
    %v704 = vpop.f32.mrf.mxu0
    %705 = vdwg.mxu0
    %v706 = vmax.f32 %v703, 0.0
    %707 = vst [vmem:[#allocation7] sm:$0xff] %v706
    // Predicated region
    $region22: #{tpu_custom_call.1} parent=1 // pred_check
      _
    $region23: #{tpu_custom_call.1} parent=1 // pred_check_branch
      %709 = sbr.rel (0) target = $region25
    $region24: #{tpu_custom_call.1} parent=1 // pred_region
      %s711 = ssub.s32 128, 128
      %712 = vsyncadd [#allocation4], %s711
      %s714 = sshll.u32 [#allocation7], 4
      %s715 = int_to_ptr.vmem [resolvable:$true] %s714
      %717 = dma.vmem_to_hbm [thread:$0]  %s715, 128, %s3, [#allocation4]
    $region25: #{tpu_custom_call.1} parent=1 // pred_fallthru
      _
    // Predicated region
    $region26: #{tpu_custom_call.1} parent=1 // pred_check
      _
    $region27: #{tpu_custom_call.1} parent=1 // pred_check_branch
      %719 = sbr.rel (0) target = $region29
    $region28: #{tpu_custom_call.1} parent=1 // pred_region
      %720 = dma.done [#allocation4], 128
    $region29: #{tpu_custom_call.1} parent=1 // pred_fallthru
      _
    %721 = vsyncpa [#allocation3], 1
    %722 = vsyncpa [#allocation6], 1
    %723 = vsyncpa [#allocation4], 1

</llo_original>
